<compile_context>
chip_gen: v7x
topology: tpu7x:2x2x1
jax: 0.10.0
libtpu: 0.0.40
codegen_flags: <defaults>
</compile_context>

<pallas_src>
import functools
import math

import jax
import jax.numpy as jnp
from jax.experimental import pallas as pl
from jax.experimental.pallas import tpu as pltpu


# Row tile for the linear kernels (mem-bound; 512 sits near the HBM roofline).
_LINEAR_ROW_TILE = 512
# Attention tiles along the q / k sequence axes (256 matches the v6e/v7x MXU;
# drop to 128 on v5e whose MXU is 128x128).
_ATTN_Q_TILE = 256
_ATTN_K_TILE = 256


def _vmem_limit(est_bytes):
    # Explicit scoped-VMEM budget (feedback: v5e default is 16 MiB, v7x physical
    # VMEM is 64 MiB).  This is an upper bound, not an allocation.
    return int(min(max(2 * est_bytes, 32 * 1024 * 1024), 64 * 1024 * 1024))


# ----------------------------------------------------------------------------
# Kernel 1: fused Q/K/V projection.
#   x: (1, tt, C) row tile, w_qkv: (3, C, C) bf16, b_qkv: (3, 1, C) f32.
#   Outputs are written directly in (B, H, T, Dh) layout via per-head static
#   slices, so no XLA head-relayout pass is needed afterwards.
# ----------------------------------------------------------------------------
def _fused_qkv_kernel(x_ref, w_ref, b_ref, q_ref, k_ref, v_ref, *, n_head, head_dim):
    x = x_ref[0].astype(jnp.bfloat16)                      # (tt, C)
    for idx, out_ref in enumerate((q_ref, k_ref, v_ref)):
        y = (jnp.dot(x, w_ref[idx], preferred_element_type=jnp.float32)
             + b_ref[idx]).astype(out_ref.dtype)           # (tt, C)
        for h in range(n_head):                            # static head split in VMEM
            out_ref[0, h] = y[:, h * head_dim:(h + 1) * head_dim]


def fused_qkv(x, w_qkv_bf16, b_qkv, n_head):
    B, T, C = x.shape
    assert C % n_head == 0
    Dh = C // n_head
    tt = min(T, _LINEAR_ROW_TILE)
    grid = (B, pl.cdiv(T, tt))

    out_sds = jax.ShapeDtypeStruct((B, n_head, T, Dh), jnp.bfloat16)
    head_out = pl.BlockSpec((1, n_head, tt, Dh), lambda b, i: (b, 0, i, 0))

    est = (2 * 3 * C * C * 2          # double-buffered bf16 stacked weight
           + 2 * tt * C * 4           # x tile (f32)
           + 2 * 3 * tt * C * 2)      # q/k/v tiles (bf16)

    return pl.pallas_call(
        functools.partial(_fused_qkv_kernel, n_head=n_head, head_dim=Dh),
        out_shape=(out_sds, out_sds, out_sds),
        grid=grid,
        in_specs=[
            pl.BlockSpec((1, tt, C), lambda b, i: (b, i, 0)),
            pl.BlockSpec((3, C, C), lambda b, i: (0, 0, 0)),
            pl.BlockSpec((3, 1, C), lambda b, i: (0, 0, 0)),
        ],
        out_specs=(head_out, head_out, head_out),
        compiler_params=pltpu.CompilerParams(
            dimension_semantics=("parallel", "parallel"),
            vmem_limit_bytes=_vmem_limit(est)),
    )(x, w_qkv_bf16, b_qkv)


# ----------------------------------------------------------------------------
# Kernel 3: output projection, row-tiled, reads the lane-dense (B, T, C) bf16
# attention output and produces the final f32 result.
# ----------------------------------------------------------------------------
def _out_proj_kernel(y_ref, w_ref, b_ref, o_ref):
    o_ref[0] = (jnp.dot(y_ref[0], w_ref[...], preferred_element_type=jnp.float32)
                + b_ref[...]).astype(o_ref.dtype)


def out_proj(y, w_bf16, b):
    B, T, C = y.shape
    tt = min(T, _LINEAR_ROW_TILE)
    est = 2 * C * C * 2 + 2 * tt * C * (2 + 4)
    return pl.pallas_call(
        _out_proj_kernel,
        out_shape=jax.ShapeDtypeStruct((B, T, C), jnp.float32),
        grid=(B, pl.cdiv(T, tt)),
        in_specs=[
            pl.BlockSpec((1, tt, C), lambda b, i: (b, i, 0)),
            pl.BlockSpec((C, C), lambda b, i: (0, 0)),
            pl.BlockSpec((1, C), lambda b, i: (0, 0)),
        ],
        out_specs=pl.BlockSpec((1, tt, C), lambda b, i: (b, i, 0)),
        compiler_params=pltpu.CompilerParams(
            dimension_semantics=("parallel", "parallel"),
            vmem_limit_bytes=_vmem_limit(est)),
    )(y, w_bf16, b.reshape(1, C))


# ----------------------------------------------------------------------------
# Kernel 2: flash-style banded attention.
#   q/k/v: (B, H, T, Dh) bf16.  Grid (B, Tq_tiles, n_kv_steps) where the kv axis
#   covers only the band; online softmax over the K axis; interior K tiles take an
#   unmasked fast path; output is written lane-dense as (B, T, C).
# ----------------------------------------------------------------------------
def _flash_band_attn_kernel(q_ref, k_ref, v_ref, o_ref, m_sc, l_sc, acc_sc,
                            *, win, tq, tk, seq_len, nkb, scale, n_head):
    qi = pl.program_id(1)
    ki = pl.program_id(2)
    q0 = qi * tq
    # Must match the kv index_map (non-negative arithmetic, no negative floor-div).
    start_blk = jnp.maximum(q0 - win, 0) // tk
    blk = start_blk + ki
    k0 = blk * tk

    @pl.when(ki == 0)
    def _init():
        m_sc[...] = jnp.full(m_sc.shape, -1e30, dtype=jnp.float32)
        l_sc[...] = jnp.zeros(l_sc.shape, dtype=jnp.float32)
        acc_sc[...] = jnp.zeros(acc_sc.shape, dtype=jnp.float32)

    in_range = blk < nkb
    overlap = jnp.logical_and(k0 <= q0 + (tq - 1) + win,
                              k0 + (tk - 1) >= q0 - win)
    process = jnp.logical_and(in_range, overlap)

    # Tile fully inside the band and fully < seq_len -> no mask work needed.
    interior = jnp.logical_and(
        jnp.logical_and(k0 >= q0 + (tq - 1) - win,
                        k0 + (tk - 1) <= q0 + win),
        k0 + tk <= seq_len)

    def accumulate(s, ok):
        m_prev = m_sc[...]
        m_new = jnp.maximum(m_prev, jnp.max(s, axis=-1, keepdims=True))
        alpha = jnp.exp(m_prev - m_new)
        p = jnp.exp(s - m_new)
        v = v_ref[0]                                       # (H, tk, Dh) bf16
        if ok is not None:
            # Explicitly zero masked probabilities (robust even when the whole
            # tile is out of band and m is still at its -1e30 fill value).
            p = jnp.where(ok, p, 0.0)
            if seq_len % tk != 0:
                # Ragged last K tile: only the masked edge path pays for this.
                kvalid = (k0 + jax.lax.broadcasted_iota(jnp.int32, (tk, 1), 0)) < seq_len
                v = jnp.where(kvalid[None, :, :], v, jnp.zeros_like(v))
        l_sc[...] = alpha * l_sc[...] + jnp.sum(p, axis=-1, keepdims=True)
        acc_sc[...] = alpha * acc_sc[...] + jax.lax.dot_general(
            p.astype(v.dtype), v, (((2,), (1,)), ((0,), (0,))),
            preferred_element_type=jnp.float32)
        m_sc[...] = m_new

    @pl.when(process)
    def _step():
        q = q_ref[0]                                       # (H, tq, Dh) bf16
        k = k_ref[0]                                       # (H, tk, Dh) bf16
        # batch over heads, contract the Dh axes (no explicit k.T), f32 accumulate.
        s = jax.lax.dot_general(
            q, k, (((2,), (2,)), ((0,), (0,))),
            preferred_element_type=jnp.float32) * scale    # (H, tq, tk)

        @pl.when(interior)
        def _fast():
            accumulate(s, None)

        @pl.when(jnp.logical_not(interior))
        def _edge():
            row = q0 + jax.lax.broadcasted_iota(jnp.int32, (tq, tk), 0)
            col = k0 + jax.lax.broadcasted_iota(jnp.int32, (tq, tk), 1)
            d = col - row
            ok = jnp.logical_and(jnp.logical_and(d >= -win, d <= win),
                                 col < seq_len)[None, :, :]
            accumulate(jnp.where(ok, s, -1e30), ok)

    @pl.when(ki == pl.num_programs(2) - 1)
    def _finalize():
        y = acc_sc[...] * pl.reciprocal(l_sc[...], approx=True)   # (H, tq, Dh) f32
        # Lane-dense (tq, C) store: concatenate heads along the last axis.
        o_ref[0] = jnp.concatenate(
            [y[h] for h in range(n_head)], axis=-1).astype(o_ref.dtype)


def masked_attention(qh, kh, vh, window):
    B, H, T, Dh = qh.shape
    C = H * Dh
    win = int(window)
    tq = min(T, _ATTN_Q_TILE)
    tk = min(T, _ATTN_K_TILE)
    nkb = pl.cdiv(T, tk)
    # K/V steps per q tile cover only the band (plus alignment slack).
    n_kv_steps = min(nkb, pl.cdiv(2 * win + tq, tk) + 1)
    grid = (B, pl.cdiv(T, tq), n_kv_steps)

    def q_index(b, qi, ki):
        return (b, 0, qi, 0)

    def kv_index(b, qi, ki):
        start_blk = jnp.maximum(qi * tq - win, 0) // tk
        return (b, 0, jnp.minimum(start_blk + ki, nkb - 1), 0)

    q_spec = pl.BlockSpec((1, H, tq, Dh), q_index)
    kv_spec = pl.BlockSpec((1, H, tk, Dh), kv_index)
    o_spec = pl.BlockSpec((1, tq, C), lambda b, qi, ki: (b, qi, 0))

    kernel = functools.partial(
        _flash_band_attn_kernel, win=win, tq=tq, tk=tk, seq_len=T, nkb=nkb,
        scale=1.0 / math.sqrt(Dh), n_head=H)

    band = min(T, 2 * win + 1)
    itm = qh.dtype.itemsize
    cost = pl.CostEstimate(
        flops=4 * B * H * T * band * Dh,
        transcendentals=B * H * T * band,
        bytes_accessed=(B * H * T * Dh * itm                                    # q
                        + 2 * B * pl.cdiv(T, tq) * n_kv_steps * H * tk * Dh * itm  # banded k+v
                        + B * T * C * 2))                                       # o (bf16)

    est_vmem = (2 * (H * tq * Dh + 2 * H * tk * Dh) * itm   # double-buffered q + k/v blocks
                + 2 * tq * C * 2                            # output block
                + (H * tq * (Dh + 2)) * 4 * 2)              # f32 scratch (+ lane-padding slop)

    return pl.pallas_call(
        kernel,
        out_shape=jax.ShapeDtypeStruct((B, T, C), jnp.bfloat16),
        grid=grid,
        in_specs=[q_spec, kv_spec, kv_spec],
        out_specs=o_spec,
        scratch_shapes=[
            pltpu.VMEM((H, tq, 1), jnp.float32),    # running max
            pltpu.VMEM((H, tq, 1), jnp.float32),    # running sum
            pltpu.VMEM((H, tq, Dh), jnp.float32),   # output accumulator
        ],
        compiler_params=pltpu.CompilerParams(
            # (B, q_tiles) is the parallel prefix feeding both v7x TensorCores.
            dimension_semantics=("parallel", "parallel", "arbitrary"),
            vmem_limit_bytes=_vmem_limit(est_vmem)),
        cost_estimate=cost,
    )(qh, kh, vh)


# ----------------------------------------------------------------------------
# get_subsequent_mask (used only by the pure-JAX reference; the kernel builds the
# band condition in-kernel and never materializes a (T, T) mask).
# ----------------------------------------------------------------------------
def get_subsequent_mask(seq_len, sliding_window_size):
    i = jnp.arange(seq_len)[:, None]
    j = jnp.arange(seq_len)[None, :]
    band = (j - i >= -sliding_window_size) & (j - i <= sliding_window_size)
    return band.astype(jnp.float32)


# ----------------------------------------------------------------------------
# MaskAttention forward
# ----------------------------------------------------------------------------
class MaskAttentionPallas:
    def __init__(self, n_embd, n_head, block_size, look_forward, downsample_rate,
                 key):
        assert n_embd % n_head == 0
        self.n_head = n_head
        self.n_embd = n_embd
        self.window = look_forward * downsample_rate
        self.max_seq_len = (block_size + look_forward) * downsample_rate

        ks = jax.random.split(key, 4)
        scale = 0.02
        # stacked (q, k, v) projections, stored (in, out) so kernels do x @ W + b.
        self.w_qkv = scale * jax.random.normal(ks[0], (3, n_embd, n_embd), jnp.float32)
        self.b_qkv = scale * jax.random.normal(ks[1], (3, 1, n_embd), jnp.float32)
        self.w_proj = scale * jax.random.normal(ks[2], (n_embd, n_embd), jnp.float32)
        self.b_proj = scale * jax.random.normal(ks[3], (n_embd,), jnp.float32)
        # bf16 copies fed to the bf16-native MXU (halves weight HBM/VMEM bytes).
        self.w_qkv_bf16 = self.w_qkv.astype(jnp.bfloat16)
        self.w_proj_bf16 = self.w_proj.astype(jnp.bfloat16)

    def __call__(self, x):
        # x: (B, T, C)
        B, T, C = x.shape
        assert T <= self.max_seq_len
        q, k, v = fused_qkv(x, self.w_qkv_bf16, self.b_qkv, self.n_head)  # (B,H,T,Dh) bf16
        y = masked_attention(q, k, v, self.window)                         # (B,T,C)  bf16
        return out_proj(y, self.w_proj_bf16, self.b_proj)                  # (B,T,C)  f32


# ----------------------------------------------------------------------------
# pure-JAX (f32) reference for a sanity check
# ----------------------------------------------------------------------------
def reference_forward(m, x):
    B, T, C = x.shape
    H = m.n_head
    Dh = C // H
    q = x @ m.w_qkv[0] + m.b_qkv[0, 0]
    k = x @ m.w_qkv[1] + m.b_qkv[1, 0]
    v = x @ m.w_qkv[2] + m.b_qkv[2, 0]
    q = q.reshape(B, T, H, Dh).transpose(0, 2, 1, 3)
    k = k.reshape(B, T, H, Dh).transpose(0, 2, 1, 3)
    v = v.reshape(B, T, H, Dh).transpose(0, 2, 1, 3)
    att = (q @ jnp.swapaxes(k, -2, -1)) * (1.0 / math.sqrt(Dh))
    mask = get_subsequent_mask(m.max_seq_len, m.window)[:T, :T][None, None]
    att = jnp.where(mask == 0.0, -1e30, att)
    att = jax.nn.softmax(att, axis=-1)
    y = att @ v
    y = y.transpose(0, 2, 1, 3).reshape(B, T, C)
    return y @ m.w_proj + m.b_proj


if __name__ == "__main__":
    # small config consistent with the module's forward
    B, T, C, H = 2, 8, 32, 4
    block_size, look_forward, downsample_rate = 8, 2, 1

    key = jax.random.PRNGKey(0)
    kparam, kx = jax.random.split(key)
    model = MaskAttentionPallas(
        n_embd=C, n_head=H, block_size=block_size,
        look_forward=look_forward, downsample_rate=downsample_rate, key=kparam,
    )

    x = jax.random.normal(kx, (B, T, C), jnp.float32)

    out = jax.block_until_ready(model(x))

    ref = reference_forward(model, x)
    assert out.shape == (B, T, C)
    # bf16 MXU path -> looser tolerance vs the pure-f32 reference.
    assert jnp.allclose(out, ref, atol=2e-2, rtol=2e-2), float(jnp.max(jnp.abs(out - ref)))

    print("KERNEL_OK")
</pallas_src>

<mosaic_0001>
module attributes {stable_mosaic.version = 11 : i64} {
  func.func @_fused_qkv_kernel(%arg0: i32, %arg1: i32, %arg2: memref<1x8x32xf32, #tpu.memory_space<vmem>>, %arg3: memref<3x32x32xbf16, #tpu.memory_space<vmem>>, %arg4: memref<3x1x32xf32, #tpu.memory_space<vmem>>, %arg5: memref<1x4x8x8xbf16, #tpu.memory_space<vmem>>, %arg6: memref<1x4x8x8xbf16, #tpu.memory_space<vmem>>, %arg7: memref<1x4x8x8xbf16, #tpu.memory_space<vmem>>) attributes {dimension_semantics = [#tpu.dimension_semantics<parallel>, #tpu.dimension_semantics<parallel>], iteration_bounds = array<i64: 2, 1>, scalar_prefetch = 0 : i64, scratch_operands = 0 : i64, tpu.core_type = #tpu.core_type<tc>, window_params = [{transform_indices = @transform_0, window_bounds = array<i64: 1, 8, 32>}, {pipeline_mode = #tpu.pipeline_mode<synchronous>, transform_indices = @transform_1, window_bounds = array<i64: 3, 32, 32>}, {pipeline_mode = #tpu.pipeline_mode<synchronous>, transform_indices = @transform_2, window_bounds = array<i64: 3, 1, 32>}, {transform_indices = @transform_3, window_bounds = array<i64: 1, 4, 8, 8>}, {transform_indices = @transform_4, window_bounds = array<i64: 1, 4, 8, 8>}, {transform_indices = @transform_5, window_bounds = array<i64: 1, 4, 8, 8>}]} {
    %c0 = arith.constant 0 : index
    %c0_0 = arith.constant 0 : index
    %c0_1 = arith.constant 0 : index
    %0 = vector.load %arg2[%c0, %c0_0, %c0_1] : memref<1x8x32xf32, #tpu.memory_space<vmem>>, vector<1x8x32xf32>
    %1 = vector.shape_cast %0 : vector<1x8x32xf32> to vector<8x32xf32>
    %2 = arith.truncf %1 : vector<8x32xf32> to vector<8x32xbf16>
    %c0_2 = arith.constant 0 : index
    %c0_3 = arith.constant 0 : index
    %c0_4 = arith.constant 0 : index
    %3 = vector.load %arg3[%c0_2, %c0_3, %c0_4] : memref<3x32x32xbf16, #tpu.memory_space<vmem>>, vector<1x32x32xbf16>
    %4 = vector.shape_cast %3 : vector<1x32x32xbf16> to vector<32x32xbf16>
    %cst = arith.constant dense<0.000000e+00> : vector<8x32xf32>
    %5 = tpu.matmul %2, %4, %cst {dimension_numbers = #tpu.dot_dimension_numbers<[1], [0], [0], [1], [0, 0, 1, 1], [], []>} : vector<8x32xbf16>, vector<32x32xbf16>, vector<8x32xf32> -> vector<8x32xf32>
    %c0_5 = arith.constant 0 : index
    %c0_6 = arith.constant 0 : index
    %c0_7 = arith.constant 0 : index
    %6 = vector.load %arg4[%c0_5, %c0_6, %c0_7] : memref<3x1x32xf32, #tpu.memory_space<vmem>>, vector<1x1x32xf32>
    %7 = vector.shape_cast %6 : vector<1x1x32xf32> to vector<1x32xf32>
    %8 = vector.broadcast %7 : vector<1x32xf32> to vector<8x32xf32>
    %9 = arith.addf %5, %8 : vector<8x32xf32>
    %10 = arith.truncf %9 : vector<8x32xf32> to vector<8x32xbf16>
    %11 = vector.extract_strided_slice %10 {offsets = [0, 0], sizes = [8, 8], strides = [1, 1]} : vector<8x32xbf16> to vector<8x8xbf16>
    %c0_8 = arith.constant 0 : index
    %c0_9 = arith.constant 0 : index
    %c0_10 = arith.constant 0 : index
    %c0_11 = arith.constant 0 : index
    %12 = vector.load %arg5[%c0_8, %c0_9, %c0_10, %c0_11] : memref<1x4x8x8xbf16, #tpu.memory_space<vmem>>, vector<1x1x8x8xbf16>
    %13 = vector.shape_cast %12 : vector<1x1x8x8xbf16> to vector<8x8xbf16>
    %14 = vector.shape_cast %11 : vector<8x8xbf16> to vector<1x1x8x8xbf16>
    tpu.vector_store %arg5[%c0_8, %c0_9, %c0_10, %c0_11], %14 {strides = array<i32>} : memref<1x4x8x8xbf16, #tpu.memory_space<vmem>>, vector<1x1x8x8xbf16>,
    %15 = vector.extract_strided_slice %10 {offsets = [0, 8], sizes = [8, 8], strides = [1, 1]} : vector<8x32xbf16> to vector<8x8xbf16>
    %c0_12 = arith.constant 0 : index
    %c1 = arith.constant 1 : index
    %c0_13 = arith.constant 0 : index
    %c0_14 = arith.constant 0 : index
    %16 = vector.load %arg5[%c0_12, %c1, %c0_13, %c0_14] : memref<1x4x8x8xbf16, #tpu.memory_space<vmem>>, vector<1x1x8x8xbf16>
    %17 = vector.shape_cast %16 : vector<1x1x8x8xbf16> to vector<8x8xbf16>
    %18 = vector.shape_cast %15 : vector<8x8xbf16> to vector<1x1x8x8xbf16>
    tpu.vector_store %arg5[%c0_12, %c1, %c0_13, %c0_14], %18 {strides = array<i32>} : memref<1x4x8x8xbf16, #tpu.memory_space<vmem>>, vector<1x1x8x8xbf16>,
    %19 = vector.extract_strided_slice %10 {offsets = [0, 16], sizes = [8, 8], strides = [1, 1]} : vector<8x32xbf16> to vector<8x8xbf16>
    %c0_15 = arith.constant 0 : index
    %c2 = arith.constant 2 : index
    %c0_16 = arith.constant 0 : index
    %c0_17 = arith.constant 0 : index
    %20 = vector.load %arg5[%c0_15, %c2, %c0_16, %c0_17] : memref<1x4x8x8xbf16, #tpu.memory_space<vmem>>, vector<1x1x8x8xbf16>
    %21 = vector.shape_cast %20 : vector<1x1x8x8xbf16> to vector<8x8xbf16>
    %22 = vector.shape_cast %19 : vector<8x8xbf16> to vector<1x1x8x8xbf16>
    tpu.vector_store %arg5[%c0_15, %c2, %c0_16, %c0_17], %22 {strides = array<i32>} : memref<1x4x8x8xbf16, #tpu.memory_space<vmem>>, vector<1x1x8x8xbf16>,
    %23 = vector.extract_strided_slice %10 {offsets = [0, 24], sizes = [8, 8], strides = [1, 1]} : vector<8x32xbf16> to vector<8x8xbf16>
    %c0_18 = arith.constant 0 : index
    %c3 = arith.constant 3 : index
    %c0_19 = arith.constant 0 : index
    %c0_20 = arith.constant 0 : index
    %24 = vector.load %arg5[%c0_18, %c3, %c0_19, %c0_20] : memref<1x4x8x8xbf16, #tpu.memory_space<vmem>>, vector<1x1x8x8xbf16>
    %25 = vector.shape_cast %24 : vector<1x1x8x8xbf16> to vector<8x8xbf16>
    %26 = vector.shape_cast %23 : vector<8x8xbf16> to vector<1x1x8x8xbf16>
    tpu.vector_store %arg5[%c0_18, %c3, %c0_19, %c0_20], %26 {strides = array<i32>} : memref<1x4x8x8xbf16, #tpu.memory_space<vmem>>, vector<1x1x8x8xbf16>,
    %c1_21 = arith.constant 1 : index
    %c0_22 = arith.constant 0 : index
    %c0_23 = arith.constant 0 : index
    %27 = vector.load %arg3[%c1_21, %c0_22, %c0_23] : memref<3x32x32xbf16, #tpu.memory_space<vmem>>, vector<1x32x32xbf16>
    %28 = vector.shape_cast %27 : vector<1x32x32xbf16> to vector<32x32xbf16>
    %cst_24 = arith.constant dense<0.000000e+00> : vector<8x32xf32>
    %29 = tpu.matmul %2, %28, %cst_24 {dimension_numbers = #tpu.dot_dimension_numbers<[1], [0], [0], [1], [0, 0, 1, 1], [], []>} : vector<8x32xbf16>, vector<32x32xbf16>, vector<8x32xf32> -> vector<8x32xf32>
    %c1_25 = arith.constant 1 : index
    %c0_26 = arith.constant 0 : index
    %c0_27 = arith.constant 0 : index
    %30 = vector.load %arg4[%c1_25, %c0_26, %c0_27] : memref<3x1x32xf32, #tpu.memory_space<vmem>>, vector<1x1x32xf32>
    %31 = vector.shape_cast %30 : vector<1x1x32xf32> to vector<1x32xf32>
    %32 = vector.broadcast %31 : vector<1x32xf32> to vector<8x32xf32>
    %33 = arith.addf %29, %32 : vector<8x32xf32>
    %34 = arith.truncf %33 : vector<8x32xf32> to vector<8x32xbf16>
    %35 = vector.extract_strided_slice %34 {offsets = [0, 0], sizes = [8, 8], strides = [1, 1]} : vector<8x32xbf16> to vector<8x8xbf16>
    %c0_28 = arith.constant 0 : index
    %c0_29 = arith.constant 0 : index
    %c0_30 = arith.constant 0 : index
    %c0_31 = arith.constant 0 : index
    %36 = vector.load %arg6[%c0_28, %c0_29, %c0_30, %c0_31] : memref<1x4x8x8xbf16, #tpu.memory_space<vmem>>, vector<1x1x8x8xbf16>
    %37 = vector.shape_cast %36 : vector<1x1x8x8xbf16> to vector<8x8xbf16>
    %38 = vector.shape_cast %35 : vector<8x8xbf16> to vector<1x1x8x8xbf16>
    tpu.vector_store %arg6[%c0_28, %c0_29, %c0_30, %c0_31], %38 {strides = array<i32>} : memref<1x4x8x8xbf16, #tpu.memory_space<vmem>>, vector<1x1x8x8xbf16>,
    %39 = vector.extract_strided_slice %34 {offsets = [0, 8], sizes = [8, 8], strides = [1, 1]} : vector<8x32xbf16> to vector<8x8xbf16>
    %c0_32 = arith.constant 0 : index
    %c1_33 = arith.constant 1 : index
    %c0_34 = arith.constant 0 : index
    %c0_35 = arith.constant 0 : index
    %40 = vector.load %arg6[%c0_32, %c1_33, %c0_34, %c0_35] : memref<1x4x8x8xbf16, #tpu.memory_space<vmem>>, vector<1x1x8x8xbf16>
    %41 = vector.shape_cast %40 : vector<1x1x8x8xbf16> to vector<8x8xbf16>
    %42 = vector.shape_cast %39 : vector<8x8xbf16> to vector<1x1x8x8xbf16>
    tpu.vector_store %arg6[%c0_32, %c1_33, %c0_34, %c0_35], %42 {strides = array<i32>} : memref<1x4x8x8xbf16, #tpu.memory_space<vmem>>, vector<1x1x8x8xbf16>,
    %43 = vector.extract_strided_slice %34 {offsets = [0, 16], sizes = [8, 8], strides = [1, 1]} : vector<8x32xbf16> to vector<8x8xbf16>
    %c0_36 = arith.constant 0 : index
    %c2_37 = arith.constant 2 : index
    %c0_38 = arith.constant 0 : index
    %c0_39 = arith.constant 0 : index
    %44 = vector.load %arg6[%c0_36, %c2_37, %c0_38, %c0_39] : memref<1x4x8x8xbf16, #tpu.memory_space<vmem>>, vector<1x1x8x8xbf16>
    %45 = vector.shape_cast %44 : vector<1x1x8x8xbf16> to vector<8x8xbf16>
    %46 = vector.shape_cast %43 : vector<8x8xbf16> to vector<1x1x8x8xbf16>
    tpu.vector_store %arg6[%c0_36, %c2_37, %c0_38, %c0_39], %46 {strides = array<i32>} : memref<1x4x8x8xbf16, #tpu.memory_space<vmem>>, vector<1x1x8x8xbf16>,
    %47 = vector.extract_strided_slice %34 {offsets = [0, 24], sizes = [8, 8], strides = [1, 1]} : vector<8x32xbf16> to vector<8x8xbf16>
    %c0_40 = arith.constant 0 : index
    %c3_41 = arith.constant 3 : index
    %c0_42 = arith.constant 0 : index
    %c0_43 = arith.constant 0 : index
    %48 = vector.load %arg6[%c0_40, %c3_41, %c0_42, %c0_43] : memref<1x4x8x8xbf16, #tpu.memory_space<vmem>>, vector<1x1x8x8xbf16>
    %49 = vector.shape_cast %48 : vector<1x1x8x8xbf16> to vector<8x8xbf16>
    %50 = vector.shape_cast %47 : vector<8x8xbf16> to vector<1x1x8x8xbf16>
    tpu.vector_store %arg6[%c0_40, %c3_41, %c0_42, %c0_43], %50 {strides = array<i32>} : memref<1x4x8x8xbf16, #tpu.memory_space<vmem>>, vector<1x1x8x8xbf16>,
    %c2_44 = arith.constant 2 : index
    %c0_45 = arith.constant 0 : index
    %c0_46 = arith.constant 0 : index
    %51 = vector.load %arg3[%c2_44, %c0_45, %c0_46] : memref<3x32x32xbf16, #tpu.memory_space<vmem>>, vector<1x32x32xbf16>
    %52 = vector.shape_cast %51 : vector<1x32x32xbf16> to vector<32x32xbf16>
    %cst_47 = arith.constant dense<0.000000e+00> : vector<8x32xf32>
    %53 = tpu.matmul %2, %52, %cst_47 {dimension_numbers = #tpu.dot_dimension_numbers<[1], [0], [0], [1], [0, 0, 1, 1], [], []>} : vector<8x32xbf16>, vector<32x32xbf16>, vector<8x32xf32> -> vector<8x32xf32>
    %c2_48 = arith.constant 2 : index
    %c0_49 = arith.constant 0 : index
    %c0_50 = arith.constant 0 : index
    %54 = vector.load %arg4[%c2_48, %c0_49, %c0_50] : memref<3x1x32xf32, #tpu.memory_space<vmem>>, vector<1x1x32xf32>
    %55 = vector.shape_cast %54 : vector<1x1x32xf32> to vector<1x32xf32>
    %56 = vector.broadcast %55 : vector<1x32xf32> to vector<8x32xf32>
    %57 = arith.addf %53, %56 : vector<8x32xf32>
    %58 = arith.truncf %57 : vector<8x32xf32> to vector<8x32xbf16>
    %59 = vector.extract_strided_slice %58 {offsets = [0, 0], sizes = [8, 8], strides = [1, 1]} : vector<8x32xbf16> to vector<8x8xbf16>
    %c0_51 = arith.constant 0 : index
    %c0_52 = arith.constant 0 : index
    %c0_53 = arith.constant 0 : index
    %c0_54 = arith.constant 0 : index
    %60 = vector.load %arg7[%c0_51, %c0_52, %c0_53, %c0_54] : memref<1x4x8x8xbf16, #tpu.memory_space<vmem>>, vector<1x1x8x8xbf16>
    %61 = vector.shape_cast %60 : vector<1x1x8x8xbf16> to vector<8x8xbf16>
    %62 = vector.shape_cast %59 : vector<8x8xbf16> to vector<1x1x8x8xbf16>
    tpu.vector_store %arg7[%c0_51, %c0_52, %c0_53, %c0_54], %62 {strides = array<i32>} : memref<1x4x8x8xbf16, #tpu.memory_space<vmem>>, vector<1x1x8x8xbf16>,
    %63 = vector.extract_strided_slice %58 {offsets = [0, 8], sizes = [8, 8], strides = [1, 1]} : vector<8x32xbf16> to vector<8x8xbf16>
    %c0_55 = arith.constant 0 : index
    %c1_56 = arith.constant 1 : index
    %c0_57 = arith.constant 0 : index
    %c0_58 = arith.constant 0 : index
    %64 = vector.load %arg7[%c0_55, %c1_56, %c0_57, %c0_58] : memref<1x4x8x8xbf16, #tpu.memory_space<vmem>>, vector<1x1x8x8xbf16>
    %65 = vector.shape_cast %64 : vector<1x1x8x8xbf16> to vector<8x8xbf16>
    %66 = vector.shape_cast %63 : vector<8x8xbf16> to vector<1x1x8x8xbf16>
    tpu.vector_store %arg7[%c0_55, %c1_56, %c0_57, %c0_58], %66 {strides = array<i32>} : memref<1x4x8x8xbf16, #tpu.memory_space<vmem>>, vector<1x1x8x8xbf16>,
    %67 = vector.extract_strided_slice %58 {offsets = [0, 16], sizes = [8, 8], strides = [1, 1]} : vector<8x32xbf16> to vector<8x8xbf16>
    %c0_59 = arith.constant 0 : index
    %c2_60 = arith.constant 2 : index
    %c0_61 = arith.constant 0 : index
    %c0_62 = arith.constant 0 : index
    %68 = vector.load %arg7[%c0_59, %c2_60, %c0_61, %c0_62] : memref<1x4x8x8xbf16, #tpu.memory_space<vmem>>, vector<1x1x8x8xbf16>
    %69 = vector.shape_cast %68 : vector<1x1x8x8xbf16> to vector<8x8xbf16>
    %70 = vector.shape_cast %67 : vector<8x8xbf16> to vector<1x1x8x8xbf16>
    tpu.vector_store %arg7[%c0_59, %c2_60, %c0_61, %c0_62], %70 {strides = array<i32>} : memref<1x4x8x8xbf16, #tpu.memory_space<vmem>>, vector<1x1x8x8xbf16>,
    %71 = vector.extract_strided_slice %58 {offsets = [0, 24], sizes = [8, 8], strides = [1, 1]} : vector<8x32xbf16> to vector<8x8xbf16>
    %c0_63 = arith.constant 0 : index
    %c3_64 = arith.constant 3 : index
    %c0_65 = arith.constant 0 : index
    %c0_66 = arith.constant 0 : index
    %72 = vector.load %arg7[%c0_63, %c3_64, %c0_65, %c0_66] : memref<1x4x8x8xbf16, #tpu.memory_space<vmem>>, vector<1x1x8x8xbf16>
    %73 = vector.shape_cast %72 : vector<1x1x8x8xbf16> to vector<8x8xbf16>
    %74 = vector.shape_cast %71 : vector<8x8xbf16> to vector<1x1x8x8xbf16>
    tpu.vector_store %arg7[%c0_63, %c3_64, %c0_65, %c0_66], %74 {strides = array<i32>} : memref<1x4x8x8xbf16, #tpu.memory_space<vmem>>, vector<1x1x8x8xbf16>,
    return
  }
  func.func @transform_0(%arg0: i32, %arg1: i32) -> (i32, i32, i32) {
    %c0_i32 = arith.constant 0 : i32
    %c0_i32_0 = arith.constant 0 : i32
    return %arg0, %arg1, %c0_i32 : i32, i32, i32
  }
  func.func @transform_1(%arg0: i32, %arg1: i32) -> (i32, i32, i32) {
    %c0_i32 = arith.constant 0 : i32
    %c0_i32_0 = arith.constant 0 : i32
    %c0_i32_1 = arith.constant 0 : i32
    %c0_i32_2 = arith.constant 0 : i32
    return %c0_i32, %c0_i32_0, %c0_i32_1 : i32, i32, i32
  }
  func.func @transform_2(%arg0: i32, %arg1: i32) -> (i32, i32, i32) {
    %c0_i32 = arith.constant 0 : i32
    %c0_i32_0 = arith.constant 0 : i32
    %c0_i32_1 = arith.constant 0 : i32
    %c0_i32_2 = arith.constant 0 : i32
    return %c0_i32, %c0_i32_0, %c0_i32_1 : i32, i32, i32
  }
  func.func @transform_3(%arg0: i32, %arg1: i32) -> (i32, i32, i32, i32) {
    %c0_i32 = arith.constant 0 : i32
    %c0_i32_0 = arith.constant 0 : i32
    %c0_i32_1 = arith.constant 0 : i32
    return %arg0, %c0_i32, %arg1, %c0_i32_0 : i32, i32, i32, i32
  }
  func.func @transform_4(%arg0: i32, %arg1: i32) -> (i32, i32, i32, i32) {
    %c0_i32 = arith.constant 0 : i32
    %c0_i32_0 = arith.constant 0 : i32
    %c0_i32_1 = arith.constant 0 : i32
    return %arg0, %c0_i32, %arg1, %c0_i32_0 : i32, i32, i32, i32
  }
  func.func @transform_5(%arg0: i32, %arg1: i32) -> (i32, i32, i32, i32) {
    %c0_i32 = arith.constant 0 : i32
    %c0_i32_0 = arith.constant 0 : i32
    %c0_i32_1 = arith.constant 0 : i32
    return %arg0, %c0_i32, %arg1, %c0_i32_0 : i32, i32, i32, i32
  }
}

</mosaic_0001>

<llo_original>
// kernel: tpu_custom_call.1
$region0: #{tpu_custom_call.1}
  #allocation0 [shape = 'u32[]', space=smem, size = 0x4, offset = 0x4, fixed_abs, tag = 'smem constant byte address 0x4 - core index']
  #allocation1 [shape = 'u32[144,128]{1,0:T(1,128)}', space=vmem, size = 0x12000, scoped, tag = 'internal scratch']
  %s0 = inlined_call_operand.hbm [shape: f32[2,8,32], index: 0, kind: input, shape index: {}]
  %s1 = inlined_call_operand.hbm [shape: bf16[3,32,32], index: 1, kind: input, shape index: {}]
  %s2 = inlined_call_operand.vmem [shape: f32[3,1,32], index: 2, kind: input, shape index: {}]
  %s3 = inlined_call_operand.hbm [shape: bf16[2,4,8,8], index: 3, kind: output, shape index: {0}]
  %s4 = inlined_call_operand.hbm [shape: bf16[2,4,8,8], index: 4, kind: output, shape index: {1}]
  %s5 = inlined_call_operand.hbm [shape: bf16[2,4,8,8], index: 5, kind: output, shape index: {2}]
  %6 = xla_tuple %s3, %s4, %s5
  %s7 = sld [smem:[#allocation0]]
  $region69: #{tpu_custom_call.1} parent=0
    _
  %s9 = ssub.s32 1, %s7
  %s10 = scalar_select 0, %s9, %s7
  $region1: #{tpu_custom_call.1} parent=0
    #allocation2 [shape = 'u8[8192]{0}', space=vmem, size = 0x2000, scoped, tag = 'input window, operand 0']
    #allocation3 [shape = 's32[2]{0}', space=sflag, size = 0x8, scoped, tag = 'scoped memory for tpu_custom_call.1']
    #allocation4 [shape = 's32[2]{0}', space=sflag, size = 0x8, scoped, tag = 'scoped memory for tpu_custom_call.1']
    #allocation5 [shape = 'u8[24576]{0}', space=vmem, size = 0x6000, scoped, tag = 'input window, operand 1, single buffered']
    #allocation6 [shape = 's32[1]{0}', space=sflag, size = 0x4, scoped, tag = 'scoped memory for tpu_custom_call.1']
    #allocation7 [shape = 'u8[16384]{0}', space=vmem, size = 0x4000, scoped, tag = 'output window, operand 0']
    #allocation8 [shape = 'u8[16384]{0}', space=vmem, size = 0x4000, scoped, tag = 'output window, operand 1']
    #allocation9 [shape = 's32[2]{0}', space=sflag, size = 0x8, scoped, tag = 'scoped memory for tpu_custom_call.1']
    #allocation10 [shape = 'u8[16384]{0}', space=vmem, size = 0x4000, scoped, tag = 'output window, operand 2']
    %11 = vsyncpa [#allocation3], 0
    %s12 = scalar_lea.sflag [#allocation3], 1
    %13 = vsyncpa %s12, 0
    %14 = vsyncpa [#allocation6], 0
    %15 = vsyncpa [#allocation4], 0
    %s16 = scalar_lea.sflag [#allocation4], 1
    %17 = vsyncpa %s16, 0
    %18 = vsyncpa [#allocation9], 0
    %s19 = scalar_lea.sflag [#allocation9], 1
    %20 = vsyncpa %s19, 0
    loop: start=0, step=1, limit=4
    $region2: #{tpu_custom_call.1} parent=1 // loop_pre_header
      _
    $region3: #{tpu_custom_call.1} parent=1 // loop_header
      %s22 = sphi 0, %s26
      %p23 = scmp.ge.s32.totalorder %s22, 4
      %s29 = sphi 0, %s41
      %s30 = sphi 0, %s37
      %s31 = sphi 0, %s29
      %s32 = sphi 0, %s30
      %s33 = sphi 0, %s31
      %s34 = sphi 0, %s32
      %s46 = sphi 0, %s48
      %s49 = sphi 0, %s46
      %s50 = sphi 0, %s49
      %s66 = sphi 0, %s50
      %s70 = sphi 0, %s70
      %s72 = sphi 0, %s70
      %s73 = sphi 0, %s72
      %s87 = sphi 0, %s73
      %s91 = sphi 0, %s91
      %s93 = sphi 0, %s91
      %s94 = sphi 0, %s93
      %s108 = sphi 0, %s94
      %s116 = sphi 0, %s118
      %s119 = sphi 0, %s116
      %s120 = sphi 0, %s119
      %s136 = sphi 0, %s120
      %s144 = sphi 0, %s146
      %s147 = sphi 0, %s144
      %s148 = sphi 0, %s147
      %s164 = sphi 0, %s148
      %s172 = sphi 0, %s174
      %s175 = sphi 0, %s172
      %s176 = sphi 0, %s175
      %s192 = sphi 0, %s176
    $region4: #{tpu_custom_call.1} parent=1 // loop_header_branch
      %25 = sbr.rel (%p23) target = $region8
    $region5: #{tpu_custom_call.1} parent=1 // loop_body
      %s27 = ssub.s32 %s22, 1
      %s28 = ssub.s32 %s22, 2
      %s35 = sadd.s32 1, %s30
      %p36 = scmp.ge.s32.totalorder %s35, 1
      %s37 = scalar_select %p36, 0, %s35
      %s38 = sadd.s32 1, %s29
      %s39 = scalar_select %p36, %s38, %s29
      %p40 = scmp.ge.s32.totalorder %s39, 2
      %s41 = scalar_select %p40, 0, %s39
      %s42 = ssub.s32 %s29, %s41
      %s43 = ssub.s32 %s30, %s37
      %s44 = sor.u32 %s42, %s43
      %p45 = scmp.eq.s32.totalorder %s44, 0
      %s47 = sadd.s32 %s46, 1
      %s48 = scalar_select %p45, %s46, %s47
      %p51 = pneg %p45
      %p52 = scmp.eq.s32.totalorder %s22, 1
      %p53 = por %p51, %p52
      %p54 = scmp.ne.s32.totalorder %s46, %s49
      %p55 = scmp.eq.s32.totalorder %s22, 0
      %p56 = por %p54, %p55
      %p57 = scmp.ne.s32.totalorder %s46, %s49
      %p58 = scmp.eq.s32.totalorder %s27, 1
      %p59 = por %p57, %p58
      %p60 = scmp.ne.s32.totalorder %s49, %s50
      %p61 = scmp.eq.s32.totalorder %s27, 0
      %p62 = por %p60, %p61
      %p63 = scmp.ne.s32.totalorder %s49, %s50
      %p64 = scmp.eq.s32.totalorder %s28, 1
      %p65 = por %p63, %p64
      %p67 = scmp.ne.s32.totalorder %s50, %s66
      %p68 = scmp.eq.s32.totalorder %s28, 0
      %p69 = por %p67, %p68
      %s71 = sadd.s32 %s70, 1
      %p74 = scmp.eq.s32.totalorder %s22, 1
      %p75 = scmp.ne.s32.totalorder %s70, %s72
      %p76 = scmp.eq.s32.totalorder %s22, 0
      %p77 = por %p75, %p76
      %p78 = scmp.ne.s32.totalorder %s70, %s72
      %p79 = scmp.eq.s32.totalorder %s27, 1
      %p80 = por %p78, %p79
      %p81 = scmp.ne.s32.totalorder %s72, %s73
      %p82 = scmp.eq.s32.totalorder %s27, 0
      %p83 = por %p81, %p82
      %p84 = scmp.ne.s32.totalorder %s72, %s73
      %p85 = scmp.eq.s32.totalorder %s28, 1
      %p86 = por %p84, %p85
      %p88 = scmp.ne.s32.totalorder %s73, %s87
      %p89 = scmp.eq.s32.totalorder %s28, 0
      %p90 = por %p88, %p89
      %s92 = sadd.s32 %s91, 1
      %p95 = scmp.eq.s32.totalorder %s22, 1
      %p96 = scmp.ne.s32.totalorder %s91, %s93
      %p97 = scmp.eq.s32.totalorder %s22, 0
      %p98 = por %p96, %p97
      %p99 = scmp.ne.s32.totalorder %s91, %s93
      %p100 = scmp.eq.s32.totalorder %s27, 1
      %p101 = por %p99, %p100
      %p102 = scmp.ne.s32.totalorder %s93, %s94
      %p103 = scmp.eq.s32.totalorder %s27, 0
      %p104 = por %p102, %p103
      %p105 = scmp.ne.s32.totalorder %s93, %s94
      %p106 = scmp.eq.s32.totalorder %s28, 1
      %p107 = por %p105, %p106
      %p109 = scmp.ne.s32.totalorder %s94, %s108
      %p110 = scmp.eq.s32.totalorder %s28, 0
      %p111 = por %p109, %p110
      %s112 = ssub.s32 %s29, %s41
      %s113 = ssub.s32 %s30, %s37
      %s114 = sor.u32 %s112, %s113
      %p115 = scmp.eq.s32.totalorder %s114, 0
      %s117 = sadd.s32 %s116, 1
      %s118 = scalar_select %p115, %s116, %s117
      %p121 = pneg %p115
      %p122 = scmp.eq.s32.totalorder %s22, 1
      %p123 = por %p121, %p122
      %p124 = scmp.ne.s32.totalorder %s116, %s119
      %p125 = scmp.eq.s32.totalorder %s22, 0
      %p126 = por %p124, %p125
      %p127 = scmp.ne.s32.totalorder %s116, %s119
      %p128 = scmp.eq.s32.totalorder %s27, 1
      %p129 = por %p127, %p128
      %p130 = scmp.ne.s32.totalorder %s119, %s120
      %p131 = scmp.eq.s32.totalorder %s27, 0
      %p132 = por %p130, %p131
      %p133 = scmp.ne.s32.totalorder %s119, %s120
      %p134 = scmp.eq.s32.totalorder %s28, 1
      %p135 = por %p133, %p134
      %p137 = scmp.ne.s32.totalorder %s120, %s136
      %p138 = scmp.eq.s32.totalorder %s28, 0
      %p139 = por %p137, %p138
      %s140 = ssub.s32 %s29, %s41
      %s141 = ssub.s32 %s30, %s37
      %s142 = sor.u32 %s140, %s141
      %p143 = scmp.eq.s32.totalorder %s142, 0
      %s145 = sadd.s32 %s144, 1
      %s146 = scalar_select %p143, %s144, %s145
      %p149 = pneg %p143
      %p150 = scmp.eq.s32.totalorder %s22, 1
      %p151 = por %p149, %p150
      %p152 = scmp.ne.s32.totalorder %s144, %s147
      %p153 = scmp.eq.s32.totalorder %s22, 0
      %p154 = por %p152, %p153
      %p155 = scmp.ne.s32.totalorder %s144, %s147
      %p156 = scmp.eq.s32.totalorder %s27, 1
      %p157 = por %p155, %p156
      %p158 = scmp.ne.s32.totalorder %s147, %s148
      %p159 = scmp.eq.s32.totalorder %s27, 0
      %p160 = por %p158, %p159
      %p161 = scmp.ne.s32.totalorder %s147, %s148
      %p162 = scmp.eq.s32.totalorder %s28, 1
      %p163 = por %p161, %p162
      %p165 = scmp.ne.s32.totalorder %s148, %s164
      %p166 = scmp.eq.s32.totalorder %s28, 0
      %p167 = por %p165, %p166
      %s168 = ssub.s32 %s29, %s41
      %s169 = ssub.s32 %s30, %s37
      %s170 = sor.u32 %s168, %s169
      %p171 = scmp.eq.s32.totalorder %s170, 0
      %s173 = sadd.s32 %s172, 1
      %s174 = scalar_select %p171, %s172, %s173
      %p177 = pneg %p171
      %p178 = scmp.eq.s32.totalorder %s22, 1
      %p179 = por %p177, %p178
      %p180 = scmp.ne.s32.totalorder %s172, %s175
      %p181 = scmp.eq.s32.totalorder %s22, 0
      %p182 = por %p180, %p181
      %p183 = scmp.ne.s32.totalorder %s172, %s175
      %p184 = scmp.eq.s32.totalorder %s27, 1
      %p185 = por %p183, %p184
      %p186 = scmp.ne.s32.totalorder %s175, %s176
      %p187 = scmp.eq.s32.totalorder %s27, 0
      %p188 = por %p186, %p187
      %p189 = scmp.ne.s32.totalorder %s175, %s176
      %p190 = scmp.eq.s32.totalorder %s28, 1
      %p191 = por %p189, %p190
      %p193 = scmp.ne.s32.totalorder %s176, %s192
      %p194 = scmp.eq.s32.totalorder %s28, 0
      %p195 = por %p193, %p194
      %p196 = scmp.le.s32.totalorder 1, %s22
      %p197 = scmp.lt.s32.totalorder %s22, 3
      %p198 = pnand %p196, %p197
      %p199 = pneg %p198
      // Predicated region
      $region9: #{tpu_custom_call.1} parent=5 // pred_check
        _
      $region10: #{tpu_custom_call.1} parent=5 // pred_check_branch
        %201 = sbr.rel (%p198) target = $region12
      $region11: #{tpu_custom_call.1} parent=5 // pred_region
        %s202 = ssub.s32 %s22, 1
        // Predicated region
        $region13: #{tpu_custom_call.1} parent=11 // pred_check
          %p203 = pneg %p83
        $region14: #{tpu_custom_call.1} parent=11 // pred_check_branch
          %205 = sbr.rel (%p203) target = $region16
        $region15: #{tpu_custom_call.1} parent=11 // pred_region
          %s207 = ssub.s32 768, 768
          %208 = vsyncadd [#allocation6], %s207
          %s209 = sshll.u32 [#allocation5], 4
          %s210 = int_to_ptr.vmem [resolvable:$true] %s209
          %215 = dma.hbm_to_vmem [thread:$0]  %s1, 768, %s210, [#allocation6], 64, 64, 4
        $region16: #{tpu_custom_call.1} parent=11 // pred_fallthru
          _
        // Predicated region
        $region17: #{tpu_custom_call.1} parent=11 // pred_check
          %p216 = pneg %p104
        $region18: #{tpu_custom_call.1} parent=11 // pred_check_branch
          %218 = sbr.rel (%p216) target = $region20
        $region19: #{tpu_custom_call.1} parent=11 // pred_region
          _
        $region20: #{tpu_custom_call.1} parent=11 // pred_fallthru
          _
      $region12: #{tpu_custom_call.1} parent=5 // pred_fallthru
        _
      %p219 = scmp.lt.s32.totalorder %s22, 2
      // Predicated region
      $region21: #{tpu_custom_call.1} parent=5 // pred_check
        %p220 = pneg %p219
      $region22: #{tpu_custom_call.1} parent=5 // pred_check_branch
        %222 = sbr.rel (%p220) target = $region24
      $region23: #{tpu_custom_call.1} parent=5 // pred_region
        // Predicated region
        $region25: #{tpu_custom_call.1} parent=23 // pred_check
          %p223 = pneg %p56
        $region26: #{tpu_custom_call.1} parent=23 // pred_check_branch
          %225 = sbr.rel (%p223) target = $region28
        $region27: #{tpu_custom_call.1} parent=23 // pred_region
          %s226 = sand.u32 %s46, 1
          %s227 = scalar_lea.sflag [#allocation3], %s226
          %s228 = sand.u32 %s46, 1
          %s229 = smul.addr %s228, 8
          %s230 = scalar_lea.vmem [#allocation2], %s229
          %s232 = ssub.s32 128, 128
          %233 = vsyncadd %s227, %s232
          %s234 = sadd.s32 %s30, %s29
          %s235 = smul.addr %s234, 128
          %s236 = scalar_lea.hbm %s0, %s235
          %s238 = sshll.u32 %s230, 4
          %s239 = int_to_ptr.vmem [resolvable:$true] %s238
          %241 = dma.hbm_to_vmem [thread:$0]  %s236, 128, %s239, %s227
        $region28: #{tpu_custom_call.1} parent=23 // pred_fallthru
          _
      $region24: #{tpu_custom_call.1} parent=5 // pred_fallthru
        _
      %p242 = scmp.le.s32.totalorder 1, %s22
      %p243 = scmp.lt.s32.totalorder %s22, 3
      %p244 = pnand %p242, %p243
      %p245 = pneg %p244
      // Predicated region
      $region29: #{tpu_custom_call.1} parent=5 // pred_check
        _
      $region30: #{tpu_custom_call.1} parent=5 // pred_check_branch
        %247 = sbr.rel (%p244) target = $region32
      $region31: #{tpu_custom_call.1} parent=5 // pred_region
        %s248 = ssub.s32 %s22, 1
        %s249 = sand.u32 %s49, 1
        %s250 = scalar_lea.sflag [#allocation3], %s249
        %s251 = sand.u32 %s49, 1
        %s252 = smul.addr %s251, 8
        %s253 = scalar_lea.vmem [#allocation2], %s252
        // Predicated region
        $region33: #{tpu_custom_call.1} parent=31 // pred_check
          %p254 = pneg %p62
        $region34: #{tpu_custom_call.1} parent=31 // pred_check_branch
          %256 = sbr.rel (%p254) target = $region36
        $region35: #{tpu_custom_call.1} parent=31 // pred_region
          %257 = dma.done %s250, 128
        $region36: #{tpu_custom_call.1} parent=31 // pred_fallthru
          _
        // Predicated region
        $region37: #{tpu_custom_call.1} parent=31 // pred_check
          %p258 = pneg %p83
        $region38: #{tpu_custom_call.1} parent=31 // pred_check_branch
          %260 = sbr.rel (%p258) target = $region40
        $region39: #{tpu_custom_call.1} parent=31 // pred_region
          %261 = dma.done [#allocation6], 768
        $region40: #{tpu_custom_call.1} parent=31 // pred_fallthru
          _
        %s262 = sand.u32 %s49, 1
        %s263 = scalar_lea.sflag [#allocation3], %s262
        %s264 = sand.u32 %s49, 1
        %s265 = smul.addr %s264, 8
        %s266 = scalar_lea.vmem [#allocation2], %s265
        %p267 = pneg %p62
        %p268 = pneg %p59
        %p269 = pneg %p83
        %p270 = pneg %p80
        %p271 = pneg %p104
        %p272 = pneg %p101
        %p273 = pneg %p132
        %p274 = pneg %p129
        %s275 = sand.u32 %s119, 1
        %s276 = scalar_lea.sflag [#allocation4], %s275
        %s277 = sand.u32 %s119, 1
        %s278 = smul.addr %s277, 16
        %s279 = scalar_lea.vmem [#allocation7], %s278
        %p280 = pneg %p160
        %p281 = pneg %p157
        %s282 = sand.u32 %s27, 1
        %s283 = scalar_lea.sflag [#allocation9], %s282
        %s284 = sand.u32 %s147, 1
        %s285 = smul.addr %s284, 16
        %s286 = scalar_lea.vmem [#allocation8], %s285
        %p287 = pneg %p188
        %p288 = pneg %p185
        %s289 = sand.u32 %s27, 1
        %s290 = scalar_lea.sflag [#allocation9], %s289
        %s291 = sand.u32 %s175, 1
        %s292 = smul.addr %s291, 16
        %s293 = scalar_lea.vmem [#allocation10], %s292
        %v295 = vld [vmem:[%s253] sm:$0xff]
        %v296 = vpack.c.bf16 %v295, %v295
        %v297 = vld [vmem:[#allocation5] sm:$0xf]
        %v298 = vld [vmem:[#allocation5 + $0x4] sm:$0xf]
        %v299 = vld [vmem:[#allocation5 + $0x8] sm:$0xf]
        %v300 = vld [vmem:[#allocation5 + $0xc] sm:$0xf]
        %v301 = vld [vmem:[%s2] sm:$0x1]
        %v303 = vlaneseq
        %v304 = vshrl.u32 %v303, 7
        %v305 = vsub.s32 0, %v304
        %v306 = vrot.slane %v301, %v305
        %v312 = vunpack.c.l.b16 %v297
        %v313 = vunpack.c.l.b16 %v298
        %v314 = vunpack.c.l.b16 %v299
        %v315 = vunpack.c.l.b16 %v300
        %v316 = vpack.c.b16 %v313, %v312
        %v317 = vpack.c.b16 %v315, %v314
        %vm320 = vcmask 261120
        %v322 = vsel %vm320, %v296, 0
        %324 = vmatprep.subr.bf16.mxu0 0
        %325 = vmatpush1.bf16.msra.mxu0 %v316
        %326 = vmatprep.subr.bf16.mxu0 0
        %327 = vmatpush1.bf16.msra.mxu0 %v317
        %328 = vmatprep.subr.bf16.mxu0 0
        %329 = vmatpush1.bf16.msra.mxu0 0
        %330 = vmatprep.subr.bf16.mxu0 0
        %331 = vmatpush1.bf16.msra.mxu0 0
        %332 = vmatprep.subr.bf16.mxu0 0
        %333 = vmatpush1.bf16.msra.mxu0 0
        %334 = vmatprep.subr.bf16.mxu0 0
        %335 = vmatpush1.bf16.msra.mxu0 0
        %336 = vmatprep.subr.bf16.mxu0 0
        %337 = vmatpush1.bf16.msra.mxu0 0
        %338 = vmatprep.subr.bf16.mxu0 0
        %339 = vmatpush1.bf16.msra.mxu0 0
        %340 = vmatprep.subr.bf16.mxu0 0
        %341 = vmatpush1.bf16.msra.mxu0 0
        %342 = vmatprep.subr.bf16.mxu0 0
        %343 = vmatpush1.bf16.msra.mxu0 0
        %344 = vmatprep.subr.bf16.mxu0 0
        %345 = vmatpush1.bf16.msra.mxu0 0
        %346 = vmatprep.subr.bf16.mxu0 0
        %347 = vmatpush1.bf16.msra.mxu0 0
        %348 = vmatprep.subr.bf16.mxu0 0
        %349 = vmatpush1.bf16.msra.mxu0 0
        %350 = vmatprep.subr.bf16.mxu0 0
        %351 = vmatpush1.bf16.msra.mxu0 0
        %352 = vmatprep.subr.bf16.mxu0 0
        %353 = vmatpush1.bf16.msra.mxu0 0
        %354 = vmatprep.subr.bf16.mxu0 0
        %355 = vmatpush1.bf16.msra.mxu0 0
        %356 = vmatprep.mubr.bf16.mxu0 0
        %357 = vmatmul.mubr.bf16.gmra.mrb[0].mxu0 %v322
        %v358 = vpop.f32.mrb[0].mxu0
        %v359 = vadd.f32 %v306, %v358
        %v360 = vpop.f32.mrb[0].mxu0
        %v361 = vpop.f32.mrb[0].mxu0
        %v362 = vpop.f32.mrb[0].mxu0
        %363 = vdwg.mxu0
        %v364 = vpack.c.bf16 %v359, %v359
        %vm365 = vcmask 60416
        %366 = vst.msk [vmem:[%s279] sm:$0xf] %vm365, %v364
        %v368 = vunpack.c.l.b16 %v364
        %v369 = vpack.c.b16 %v368, %v368
        %370 = vrot.lane.b32.xlu0 %v369, 120
        %v371 = vpop.permute.xlu0 %370
        %s373 = scalar_lea.vmem %s279, 4 [#allocation7]
        %374 = vst.msk [vmem:[%s373] sm:$0xf] %vm365, %v371
        %375 = vrot.lane.b32.xlu0 %v369, 112
        %v376 = vpop.permute.xlu0 %375
        %s378 = scalar_lea.vmem %s279, 8 [#allocation7]
        %379 = vst.msk [vmem:[%s378] sm:$0xf] %vm365, %v376
        %380 = vrot.lane.b32.xlu0 %v369, 104
        %v381 = vpop.permute.xlu0 %380
        %s383 = scalar_lea.vmem %s279, 12 [#allocation7]
        %384 = vst.msk [vmem:[%s383] sm:$0xf] %vm365, %v381
        %s385 = scalar_lea.vmem [#allocation5], 16
        %v386 = vld [vmem:[%s385] sm:$0xf]
        %v387 = vld [vmem:[%s385 + $0x4] sm:$0xf]
        %v388 = vld [vmem:[%s385 + $0x8] sm:$0xf]
        %v389 = vld [vmem:[%s385 + $0xc] sm:$0xf]
        %s390 = scalar_lea.vmem %s2, 1
        %v391 = vld [vmem:[%s390] sm:$0x1]
        %v393 = vlaneseq
        %v394 = vshrl.u32 %v393, 7
        %v395 = vsub.s32 0, %v394
        %v396 = vrot.slane %v391, %v395
        %v402 = vunpack.c.l.b16 %v386
        %v403 = vunpack.c.l.b16 %v387
        %v404 = vunpack.c.l.b16 %v388
        %v405 = vunpack.c.l.b16 %v389
        %v406 = vpack.c.b16 %v403, %v402
        %v407 = vpack.c.b16 %v405, %v404
        %410 = vmatprep.subr.bf16.mxu0 0
        %411 = vmatpush1.bf16.msra.mxu0 %v406
        %412 = vmatprep.subr.bf16.mxu0 0
        %413 = vmatpush1.bf16.msra.mxu0 %v407
        %414 = vmatprep.subr.bf16.mxu0 0
        %415 = vmatpush1.bf16.msra.mxu0 0
        %416 = vmatprep.subr.bf16.mxu0 0
        %417 = vmatpush1.bf16.msra.mxu0 0
        %418 = vmatprep.subr.bf16.mxu0 0
        %419 = vmatpush1.bf16.msra.mxu0 0
        %420 = vmatprep.subr.bf16.mxu0 0
        %421 = vmatpush1.bf16.msra.mxu0 0
        %422 = vmatprep.subr.bf16.mxu0 0
        %423 = vmatpush1.bf16.msra.mxu0 0
        %424 = vmatprep.subr.bf16.mxu0 0
        %425 = vmatpush1.bf16.msra.mxu0 0
        %426 = vmatprep.subr.bf16.mxu0 0
        %427 = vmatpush1.bf16.msra.mxu0 0
        %428 = vmatprep.subr.bf16.mxu0 0
        %429 = vmatpush1.bf16.msra.mxu0 0
        %430 = vmatprep.subr.bf16.mxu0 0
        %431 = vmatpush1.bf16.msra.mxu0 0
        %432 = vmatprep.subr.bf16.mxu0 0
        %433 = vmatpush1.bf16.msra.mxu0 0
        %434 = vmatprep.subr.bf16.mxu0 0
        %435 = vmatpush1.bf16.msra.mxu0 0
        %436 = vmatprep.subr.bf16.mxu0 0
        %437 = vmatpush1.bf16.msra.mxu0 0
        %438 = vmatprep.subr.bf16.mxu0 0
        %439 = vmatpush1.bf16.msra.mxu0 0
        %440 = vmatprep.subr.bf16.mxu0 0
        %441 = vmatpush1.bf16.msra.mxu0 0
        %442 = vmatprep.mubr.bf16.mxu0 0
        %443 = vmatmul.mubr.bf16.gmra.mrb[0].mxu0 %v322
        %v444 = vpop.f32.mrb[0].mxu0
        %v445 = vadd.f32 %v396, %v444
        %v446 = vpop.f32.mrb[0].mxu0
        %v447 = vpop.f32.mrb[0].mxu0
        %v448 = vpop.f32.mrb[0].mxu0
        %449 = vdwg.mxu0
        %v450 = vpack.c.bf16 %v445, %v445
        %451 = vst.msk [vmem:[%s286] sm:$0xf] %vm365, %v450
        %v453 = vunpack.c.l.b16 %v450
        %v454 = vpack.c.b16 %v453, %v453
        %455 = vrot.lane.b32.xlu0 %v454, 120
        %v456 = vpop.permute.xlu0 %455
        %s458 = scalar_lea.vmem %s286, 4 [#allocation8]
        %459 = vst.msk [vmem:[%s458] sm:$0xf] %vm365, %v456
        %460 = vrot.lane.b32.xlu0 %v454, 112
        %v461 = vpop.permute.xlu0 %460
        %s463 = scalar_lea.vmem %s286, 8 [#allocation8]
        %464 = vst.msk [vmem:[%s463] sm:$0xf] %vm365, %v461
        %465 = vrot.lane.b32.xlu0 %v454, 104
        %v466 = vpop.permute.xlu0 %465
        %s468 = scalar_lea.vmem %s286, 12 [#allocation8]
        %469 = vst.msk [vmem:[%s468] sm:$0xf] %vm365, %v466
        %s470 = scalar_lea.vmem [#allocation5], 32
        %v471 = vld [vmem:[%s470] sm:$0xf]
        %v472 = vld [vmem:[%s470 + $0x4] sm:$0xf]
        %v473 = vld [vmem:[%s470 + $0x8] sm:$0xf]
        %v474 = vld [vmem:[%s470 + $0xc] sm:$0xf]
        %s475 = scalar_lea.vmem %s2, 2
        %v476 = vld [vmem:[%s475] sm:$0x1]
        %v478 = vlaneseq
        %v479 = vshrl.u32 %v478, 7
        %v480 = vsub.s32 0, %v479
        %v481 = vrot.slane %v476, %v480
        %v487 = vunpack.c.l.b16 %v471
        %v488 = vunpack.c.l.b16 %v472
        %v489 = vunpack.c.l.b16 %v473
        %v490 = vunpack.c.l.b16 %v474
        %v491 = vpack.c.b16 %v488, %v487
        %v492 = vpack.c.b16 %v490, %v489
        %495 = vmatprep.subr.bf16.mxu0 0
        %496 = vmatpush1.bf16.msra.mxu0 %v491
        %497 = vmatprep.subr.bf16.mxu0 0
        %498 = vmatpush1.bf16.msra.mxu0 %v492
        %499 = vmatprep.subr.bf16.mxu0 0
        %500 = vmatpush1.bf16.msra.mxu0 0
        %501 = vmatprep.subr.bf16.mxu0 0
        %502 = vmatpush1.bf16.msra.mxu0 0
        %503 = vmatprep.subr.bf16.mxu0 0
        %504 = vmatpush1.bf16.msra.mxu0 0
        %505 = vmatprep.subr.bf16.mxu0 0
        %506 = vmatpush1.bf16.msra.mxu0 0
        %507 = vmatprep.subr.bf16.mxu0 0
        %508 = vmatpush1.bf16.msra.mxu0 0
        %509 = vmatprep.subr.bf16.mxu0 0
        %510 = vmatpush1.bf16.msra.mxu0 0
        %511 = vmatprep.subr.bf16.mxu0 0
        %512 = vmatpush1.bf16.msra.mxu0 0
        %513 = vmatprep.subr.bf16.mxu0 0
        %514 = vmatpush1.bf16.msra.mxu0 0
        %515 = vmatprep.subr.bf16.mxu0 0
        %516 = vmatpush1.bf16.msra.mxu0 0
        %517 = vmatprep.subr.bf16.mxu0 0
        %518 = vmatpush1.bf16.msra.mxu0 0
        %519 = vmatprep.subr.bf16.mxu0 0
        %520 = vmatpush1.bf16.msra.mxu0 0
        %521 = vmatprep.subr.bf16.mxu0 0
        %522 = vmatpush1.bf16.msra.mxu0 0
        %523 = vmatprep.subr.bf16.mxu0 0
        %524 = vmatpush1.bf16.msra.mxu0 0
        %525 = vmatprep.subr.bf16.mxu0 0
        %526 = vmatpush1.bf16.msra.mxu0 0
        %527 = vmatprep.mubr.bf16.mxu0 0
        %528 = vmatmul.mubr.bf16.gmra.mrb[0].mxu0 %v322
        %v529 = vpop.f32.mrb[0].mxu0
        %v530 = vadd.f32 %v481, %v529
        %v531 = vpop.f32.mrb[0].mxu0
        %v532 = vpop.f32.mrb[0].mxu0
        %v533 = vpop.f32.mrb[0].mxu0
        %534 = vdwg.mxu0
        %v535 = vpack.c.bf16 %v530, %v530
        %536 = vst.msk [vmem:[%s293] sm:$0xf] %vm365, %v535
        %v538 = vunpack.c.l.b16 %v535
        %v539 = vpack.c.b16 %v538, %v538
        %540 = vrot.lane.b32.xlu0 %v539, 120
        %v541 = vpop.permute.xlu0 %540
        %s543 = scalar_lea.vmem %s293, 4 [#allocation10]
        %544 = vst.msk [vmem:[%s543] sm:$0xf] %vm365, %v541
        %545 = vrot.lane.b32.xlu0 %v539, 112
        %v546 = vpop.permute.xlu0 %545
        %s548 = scalar_lea.vmem %s293, 8 [#allocation10]
        %549 = vst.msk [vmem:[%s548] sm:$0xf] %vm365, %v546
        %550 = vrot.lane.b32.xlu0 %v539, 104
        %v551 = vpop.permute.xlu0 %550
        %s553 = scalar_lea.vmem %s293, 12 [#allocation10]
        %554 = vst.msk [vmem:[%s553] sm:$0xf] %vm365, %v551
        %s555 = sand.u32 %s119, 1
        %s556 = scalar_lea.sflag [#allocation4], %s555
        %s557 = sand.u32 %s119, 1
        %s558 = smul.addr %s557, 16
        %s559 = scalar_lea.vmem [#allocation7], %s558
        %s560 = sand.u32 %s27, 1
        %s561 = scalar_lea.sflag [#allocation9], %s560
        %s562 = sand.u32 %s147, 1
        %s563 = smul.addr %s562, 16
        %s564 = scalar_lea.vmem [#allocation8], %s563
        %s565 = sand.u32 %s27, 1
        %s566 = scalar_lea.sflag [#allocation9], %s565
        %s567 = sand.u32 %s175, 1
        %s568 = smul.addr %s567, 16
        %s569 = scalar_lea.vmem [#allocation10], %s568
        // Predicated region
        $region41: #{tpu_custom_call.1} parent=31 // pred_check
          %p570 = pneg %p129
        $region42: #{tpu_custom_call.1} parent=31 // pred_check_branch
          %572 = sbr.rel (%p570) target = $region44
        $region43: #{tpu_custom_call.1} parent=31 // pred_region
          %s574 = ssub.s32 256, 256
          %575 = vsyncadd %s556, %s574
          %s576 = smul.addr %s31, 4
          %s577 = sadd.s32 %s32, %s576
          %s578 = smul.addr %s577, 64
          %s579 = scalar_lea.hbm %s3, %s578
          %s580 = sshll.u32 %s559, 4
          %s581 = int_to_ptr.vmem [resolvable:$true] %s580
          %586 = dma.vmem_to_hbm [thread:$0]  %s581, 256, %s579, %s556, 64, 64, 4
        $region44: #{tpu_custom_call.1} parent=31 // pred_fallthru
          _
        // Predicated region
        $region45: #{tpu_custom_call.1} parent=31 // pred_check
          %p587 = pneg %p157
        $region46: #{tpu_custom_call.1} parent=31 // pred_check_branch
          %589 = sbr.rel (%p587) target = $region48
        $region47: #{tpu_custom_call.1} parent=31 // pred_region
          %s591 = ssub.s32 256, 256
          %592 = vsyncadd %s561, %s591
          %s593 = smul.addr %s31, 4
          %s594 = sadd.s32 %s32, %s593
          %s595 = smul.addr %s594, 64
          %s596 = scalar_lea.hbm %s4, %s595
          %s597 = sshll.u32 %s564, 4
          %s598 = int_to_ptr.vmem [resolvable:$true] %s597
          %603 = dma.vmem_to_hbm [thread:$0]  %s598, 256, %s596, %s561, 64, 64, 4
        $region48: #{tpu_custom_call.1} parent=31 // pred_fallthru
          _
        // Predicated region
        $region49: #{tpu_custom_call.1} parent=31 // pred_check
          %p604 = pneg %p185
        $region50: #{tpu_custom_call.1} parent=31 // pred_check_branch
          %606 = sbr.rel (%p604) target = $region52
        $region51: #{tpu_custom_call.1} parent=31 // pred_region
          %s608 = ssub.s32 256, 256
          %609 = vsyncadd %s566, %s608
          %s610 = smul.addr %s31, 4
          %s611 = sadd.s32 %s32, %s610
          %s612 = smul.addr %s611, 64
          %s613 = scalar_lea.hbm %s5, %s612
          %s614 = sshll.u32 %s569, 4
          %s615 = int_to_ptr.vmem [resolvable:$true] %s614
          %620 = dma.vmem_to_hbm [thread:$0]  %s615, 256, %s613, %s566, 64, 64, 4
        $region52: #{tpu_custom_call.1} parent=31 // pred_fallthru
          _
      $region32: #{tpu_custom_call.1} parent=5 // pred_fallthru
        _
      %p621 = scmp.le.s32.totalorder 2, %s22
      // Predicated region
      $region53: #{tpu_custom_call.1} parent=5 // pred_check
        %p622 = pneg %p621
      $region54: #{tpu_custom_call.1} parent=5 // pred_check_branch
        %624 = sbr.rel (%p622) target = $region56
      $region55: #{tpu_custom_call.1} parent=5 // pred_region
        %s625 = ssub.s32 %s22, 2
        // Predicated region
        $region57: #{tpu_custom_call.1} parent=55 // pred_check
          %p626 = pneg %p135
        $region58: #{tpu_custom_call.1} parent=55 // pred_check_branch
          %628 = sbr.rel (%p626) target = $region60
        $region59: #{tpu_custom_call.1} parent=55 // pred_region
          %s629 = sand.u32 %s120, 1
          %s630 = scalar_lea.sflag [#allocation4], %s629
          %s631 = sand.u32 %s120, 1
          %s632 = smul.addr %s631, 16
          %s633 = scalar_lea.vmem [#allocation7], %s632
          %634 = dma.done %s630, 256
        $region60: #{tpu_custom_call.1} parent=55 // pred_fallthru
          _
        // Predicated region
        $region61: #{tpu_custom_call.1} parent=55 // pred_check
          %p635 = pneg %p163
        $region62: #{tpu_custom_call.1} parent=55 // pred_check_branch
          %637 = sbr.rel (%p635) target = $region64
        $region63: #{tpu_custom_call.1} parent=55 // pred_region
          %s638 = sand.u32 %s28, 1
          %s639 = scalar_lea.sflag [#allocation9], %s638
          %s640 = sand.u32 %s148, 1
          %s641 = smul.addr %s640, 16
          %s642 = scalar_lea.vmem [#allocation8], %s641
          %643 = dma.done %s639, 256
        $region64: #{tpu_custom_call.1} parent=55 // pred_fallthru
          _
        // Predicated region
        $region65: #{tpu_custom_call.1} parent=55 // pred_check
          %p644 = pneg %p191
        $region66: #{tpu_custom_call.1} parent=55 // pred_check_branch
          %646 = sbr.rel (%p644) target = $region68
        $region67: #{tpu_custom_call.1} parent=55 // pred_region
          %s647 = sand.u32 %s28, 1
          %s648 = scalar_lea.sflag [#allocation9], %s647
          %s649 = sand.u32 %s176, 1
          %s650 = smul.addr %s649, 16
          %s651 = scalar_lea.vmem [#allocation10], %s650
          %652 = dma.done %s648, 256
        $region68: #{tpu_custom_call.1} parent=55 // pred_fallthru
          _
      $region56: #{tpu_custom_call.1} parent=5 // pred_fallthru
        _
    $region6: #{tpu_custom_call.1} parent=1 // loop_footer
      %s26 = sadd.s32 1, %s22
    $region7: #{tpu_custom_call.1} parent=1 // loop_footer_branch
      %21 = sbr.rel target = $region3
    $region8: #{tpu_custom_call.1} parent=1 // loop_exit
      _
    %653 = vsyncpa [#allocation3], 1
    %s654 = scalar_lea.sflag [#allocation3], 1
    %655 = vsyncpa %s654, 1
    %656 = vsyncpa [#allocation6], 1
    %657 = vsyncpa [#allocation4], 1
    %s658 = scalar_lea.sflag [#allocation4], 1
    %659 = vsyncpa %s658, 1
    %660 = vsyncpa [#allocation9], 1
    %s661 = scalar_lea.sflag [#allocation9], 1
    %662 = vsyncpa %s661, 1

</llo_original>
